<compile_context>
chip_gen: v7x
topology: tpu7x:2x2x1
jax: 0.10.0
libtpu: 0.0.40
codegen_flags: <defaults>
</compile_context>

<pallas_src>
import jax
import jax.numpy as jnp
from jax import lax
from jax.experimental import pallas as pl
from jax.experimental.pallas import tpu as pltpu


def _matmul_bias_swish_kernel(p_ref, w_ref, b_ref, o_ref):
    # p_ref: (1, 9C, TR) bf16 -- im2col patch tile; contracting dim on
    #                            sublanes, lane dim TR is a multiple of 128.
    # w_ref: (OC, 9C)    bf16 -- conv weights, rows = oc, cols = (kh, kw, c).
    # b_ref: (OC, 1)     f32
    # o_ref: (1, OC, TR)      -- channel-major conv+bias+swish tile.
    acc = jnp.dot(w_ref[...], p_ref[0],
                  preferred_element_type=jnp.float32)     # (OC, TR) f32 on MXU
    acc = acc + b_ref[...]                                # (OC, 1) broadcasts over lanes
    y = acc * jax.nn.sigmoid(acc)                         # swish (sigmoid on EUP)
    o_ref[0] = y.astype(o_ref.dtype)


def _pick_tile_r(R, target_rows):
    """Tile length along the flattened-pixel axis: a multiple of 128.

    If the image has >= target_rows pixels, use target_rows (rounded down to a
    multiple of 128); otherwise use one tile padded up to the next multiple of
    128.  Never falls back to a non-128-multiple (avoids masked stores)."""
    tr_target = max(128, (target_rows // 128) * 128)
    if R >= tr_target:
        return tr_target
    return ((R + 127) // 128) * 128


def upsample_block(x_nchw, weight_oihw, bias, *, target_rows=512, out_dtype=None):
    """Forward of UpsampleBlock. x_nchw: (N, C, H, W) -> (N, C, 2H, 2W)."""
    N, C, H, W = x_nchw.shape
    OC = weight_oihw.shape[0]
    assert OC == 4 * C, (OC, C)
    assert weight_oihw.shape == (OC, C, 3, 3), weight_oihw.shape
    out_dtype = x_nchw.dtype if out_dtype is None else out_dtype

    # ---- wrapper-side im2col (one XLA pass), bf16, channel-major ----------
    # patches[n, (kh*3+kw)*C + c, h*W + w] = x_pad[n, c, h+kh, w+kw]
    x_pad = jnp.pad(x_nchw, ((0, 0), (0, 0), (1, 1), (1, 1)))
    taps = [x_pad[:, :, kh:kh + H, kw:kw + W]             # each (N, C, H, W)
            for kh in range(3) for kw in range(3)]
    patches = jnp.stack(taps, axis=1)                     # (N, 9, C, H, W)
    patches = patches.reshape(N, 9 * C, H * W).astype(jnp.bfloat16)

    R = H * W
    TR = _pick_tile_r(R, target_rows)
    R_pad = ((R + TR - 1) // TR) * TR
    if R_pad != R:
        patches = jnp.pad(patches, ((0, 0), (0, 0), (0, R_pad - R)))
    nR = R_pad // TR

    # Weights: OIHW -> (OC, kh, kw, c) -> (OC, 9C); column order matches the
    # patch row order (kh, kw, c).  bf16 operands, f32 accumulate on the MXU.
    w_mat = jnp.transpose(weight_oihw, (0, 2, 3, 1)).reshape(OC, 9 * C)
    w_mat = w_mat.astype(jnp.bfloat16)
    b_col = bias.astype(jnp.float32).reshape(OC, 1)

    conv_flat = pl.pallas_call(
        _matmul_bias_swish_kernel,
        out_shape=jax.ShapeDtypeStruct((N, OC, R_pad), out_dtype),
        grid=(N, nR),
        in_specs=[
            pl.BlockSpec((1, 9 * C, TR), lambda n, r: (n, 0, r)),
            pl.BlockSpec((OC, 9 * C), lambda n, r: (0, 0)),   # tiny, h-invariant
            pl.BlockSpec((OC, 1), lambda n, r: (0, 0)),
        ],
        out_specs=pl.BlockSpec((1, OC, TR), lambda n, r: (n, 0, r)),
        compiler_params=pltpu.CompilerParams(
            dimension_semantics=("parallel", "parallel")),
    )(patches, w_mat, b_col)

    # Kernel output is the NCHW conv+bias+swish result, flattened over (H, W).
    conv_nchw = conv_flat[:, :, :R].reshape(N, OC, H, W)

    # PixelShuffle(2): oc = c*4 + i*2 + j -> out[n, c, 2h+i, 2w+j].
    # (swish commutes with this elementwise permutation, so applying it before
    #  the shuffle is exact.)
    y = conv_nchw.reshape(N, C, 2, 2, H, W)
    y = jnp.transpose(y, (0, 1, 4, 2, 5, 3)).reshape(N, C, 2 * H, 2 * W)
    return y


def upsample_block_ref(x_nchw, weight_oihw, bias):
    """Pure-JAX f32 reference (mirrors the PyTorch module) for validation."""
    conv = lax.conv_general_dilated(
        x_nchw, weight_oihw, window_strides=(1, 1), padding=((1, 1), (1, 1)),
        dimension_numbers=("NCHW", "OIHW", "NCHW"))
    conv = conv + bias.reshape(1, -1, 1, 1)
    N, OC, H, W = conv.shape
    C = OC // 4
    y = conv.reshape(N, C, 2, 2, H, W)
    y = jnp.transpose(y, (0, 1, 4, 2, 5, 3)).reshape(N, C, 2 * H, 2 * W)
    return y * jax.nn.sigmoid(y)


if __name__ == "__main__":
    key = jax.random.PRNGKey(0)
    kx, kw, kb = jax.random.split(key, 3)

    N, C, H, W = 2, 8, 16, 16            # in_channels = 8
    OC = 4 * C

    x = jax.random.normal(kx, (N, C, H, W), dtype=jnp.float32)
    weight = 0.05 * jax.random.normal(kw, (OC, C, 3, 3), dtype=jnp.float32)
    bias = 0.05 * jax.random.normal(kb, (OC,), dtype=jnp.float32)

    out = jax.block_until_ready(jax.jit(upsample_block)(x, weight, bias))
    ref = upsample_block_ref(x, weight, bias)

    assert out.shape == (N, C, 2 * H, 2 * W), out.shape
    max_err = float(jnp.max(jnp.abs(out - ref)))
    assert jnp.allclose(out, ref, atol=2e-2, rtol=2e-2), max_err

    print("KERNEL_OK")
</pallas_src>

<mosaic_0001>
module attributes {stable_mosaic.version = 11 : i64} {
  func.func @_matmul_bias_swish_kernel(%arg0: i32, %arg1: i32, %arg2: memref<1x72x256xbf16, #tpu.memory_space<vmem>>, %arg3: memref<32x72xbf16, #tpu.memory_space<vmem>>, %arg4: memref<32x1xf32, #tpu.memory_space<vmem>>, %arg5: memref<1x32x256xf32, #tpu.memory_space<vmem>>) attributes {dimension_semantics = [#tpu.dimension_semantics<parallel>, #tpu.dimension_semantics<parallel>], iteration_bounds = array<i64: 2, 1>, scalar_prefetch = 0 : i64, scratch_operands = 0 : i64, tpu.core_type = #tpu.core_type<tc>, window_params = [{transform_indices = @transform_0, window_bounds = array<i64: 1, 72, 256>}, {pipeline_mode = #tpu.pipeline_mode<synchronous>, transform_indices = @transform_1, window_bounds = array<i64: 32, 72>}, {pipeline_mode = #tpu.pipeline_mode<synchronous>, transform_indices = @transform_2, window_bounds = array<i64: 32, 1>}, {transform_indices = @transform_3, window_bounds = array<i64: 1, 32, 256>}]} {
    %c0 = arith.constant 0 : index
    %c0_0 = arith.constant 0 : index
    %0 = vector.load %arg3[%c0, %c0_0] : memref<32x72xbf16, #tpu.memory_space<vmem>>, vector<32x72xbf16>
    %c0_1 = arith.constant 0 : index
    %c0_2 = arith.constant 0 : index
    %c0_3 = arith.constant 0 : index
    %1 = vector.load %arg2[%c0_1, %c0_2, %c0_3] : memref<1x72x256xbf16, #tpu.memory_space<vmem>>, vector<1x72x256xbf16>
    %2 = vector.shape_cast %1 : vector<1x72x256xbf16> to vector<72x256xbf16>
    %cst = arith.constant dense<0.000000e+00> : vector<32x256xf32>
    %3 = tpu.matmul %0, %2, %cst {dimension_numbers = #tpu.dot_dimension_numbers<[1], [0], [0], [1], [0, 0, 1, 1], [], []>} : vector<32x72xbf16>, vector<72x256xbf16>, vector<32x256xf32> -> vector<32x256xf32>
    %c0_4 = arith.constant 0 : index
    %c0_5 = arith.constant 0 : index
    %4 = vector.load %arg4[%c0_4, %c0_5] : memref<32x1xf32, #tpu.memory_space<vmem>>, vector<32x1xf32>
    %5 = vector.broadcast %4 : vector<32x1xf32> to vector<32x256xf32>
    %6 = arith.addf %3, %5 : vector<32x256xf32>
    %7 = arith.negf %6 : vector<32x256xf32>
    %8 = math.exp %7 : vector<32x256xf32>
    %cst_6 = arith.constant 1.000000e+00 : f32
    %9 = vector.broadcast %cst_6 : f32 to vector<32x256xf32>
    %10 = arith.addf %9, %8 : vector<32x256xf32>
    %11 = arith.divf %9, %10 : vector<32x256xf32>
    %12 = arith.mulf %6, %11 : vector<32x256xf32>
    %c0_7 = arith.constant 0 : index
    %c0_8 = arith.constant 0 : index
    %c0_9 = arith.constant 0 : index
    %13 = vector.load %arg5[%c0_7, %c0_8, %c0_9] : memref<1x32x256xf32, #tpu.memory_space<vmem>>, vector<1x32x256xf32>
    %14 = vector.shape_cast %13 : vector<1x32x256xf32> to vector<32x256xf32>
    %15 = vector.shape_cast %12 : vector<32x256xf32> to vector<1x32x256xf32>
    tpu.vector_store %arg5[%c0_7, %c0_8, %c0_9], %15 {strides = array<i32>} : memref<1x32x256xf32, #tpu.memory_space<vmem>>, vector<1x32x256xf32>,
    return
  }
  func.func @transform_0(%arg0: i32, %arg1: i32) -> (i32, i32, i32) {
    %c0_i32 = arith.constant 0 : i32
    %c0_i32_0 = arith.constant 0 : i32
    return %arg0, %c0_i32, %arg1 : i32, i32, i32
  }
  func.func @transform_1(%arg0: i32, %arg1: i32) -> (i32, i32) {
    %c0_i32 = arith.constant 0 : i32
    %c0_i32_0 = arith.constant 0 : i32
    %c0_i32_1 = arith.constant 0 : i32
    return %c0_i32, %c0_i32_0 : i32, i32
  }
  func.func @transform_2(%arg0: i32, %arg1: i32) -> (i32, i32) {
    %c0_i32 = arith.constant 0 : i32
    %c0_i32_0 = arith.constant 0 : i32
    %c0_i32_1 = arith.constant 0 : i32
    return %c0_i32, %c0_i32_0 : i32, i32
  }
  func.func @transform_3(%arg0: i32, %arg1: i32) -> (i32, i32, i32) {
    %c0_i32 = arith.constant 0 : i32
    %c0_i32_0 = arith.constant 0 : i32
    return %arg0, %c0_i32, %arg1 : i32, i32, i32
  }
}

</mosaic_0001>

<llo_original>
// kernel: upsample_block.1
$region0: #{upsample_block.1}
  #allocation0 [shape = 'u32[]', space=smem, size = 0x4, offset = 0x4, fixed_abs, tag = 'smem constant byte address 0x4 - core index']
  #allocation1 [shape = 'u32[144,128]{1,0:T(1,128)}', space=vmem, size = 0x12000, scoped, tag = 'internal scratch']
  %s0 = inlined_call_operand.vmem [shape: bf16[2,72,256], index: 0, kind: input, shape index: {}]
  %s1 = inlined_call_operand.vmem [shape: bf16[32,72], index: 1, kind: input, shape index: {}]
  %s2 = inlined_call_operand.vmem [shape: f32[32,1], index: 2, kind: input, shape index: {}]
  %s3 = inlined_call_operand.vmem [shape: f32[2,32,256], index: 3, kind: output, shape index: {}]
  %s4 = sld [smem:[#allocation0]]
  $region45: #{upsample_block.1} parent=0
    _
  %s6 = ssub.s32 1, %s4
  %s7 = scalar_select 0, %s6, %s4
  loop: start=0, step=1, limit=4
  $region2: #{upsample_block.1} parent=0 // loop_pre_header
    _
  $region3: #{upsample_block.1} parent=0 // loop_header
    %s9 = sphi 0, %s13
    %p10 = scmp.ge.s32.totalorder %s9, 4
    %s16 = sphi 0, %s28
    %s17 = sphi 0, %s24
    %s18 = sphi 0, %s16
    %s19 = sphi 0, %s17
    %s20 = sphi 0, %s18
    %s21 = sphi 0, %s19
    %s33 = sphi 0, %s35
    %s36 = sphi 0, %s33
    %s37 = sphi 0, %s36
    %s53 = sphi 0, %s37
    %s57 = sphi 0, %s57
    %s59 = sphi 0, %s57
    %s60 = sphi 0, %s59
    %s74 = sphi 0, %s60
    %s78 = sphi 0, %s78
    %s80 = sphi 0, %s78
    %s81 = sphi 0, %s80
    %s95 = sphi 0, %s81
    %s103 = sphi 0, %s105
    %s106 = sphi 0, %s103
    %s107 = sphi 0, %s106
    %s123 = sphi 0, %s107
  $region4: #{upsample_block.1} parent=0 // loop_header_branch
    %12 = sbr.rel (%p10) target = $region8
  $region5: #{upsample_block.1} parent=0 // loop_body
    %s14 = ssub.s32 %s9, 1
    %s15 = ssub.s32 %s9, 2
    %s22 = sadd.s32 1, %s17
    %p23 = scmp.ge.s32.totalorder %s22, 1
    %s24 = scalar_select %p23, 0, %s22
    %s25 = sadd.s32 1, %s16
    %s26 = scalar_select %p23, %s25, %s16
    %p27 = scmp.ge.s32.totalorder %s26, 2
    %s28 = scalar_select %p27, 0, %s26
    %s29 = ssub.s32 %s16, %s28
    %s30 = ssub.s32 %s17, %s24
    %s31 = sor.u32 %s29, %s30
    %p32 = scmp.eq.s32.totalorder %s31, 0
    %s34 = sadd.s32 %s33, 1
    %s35 = scalar_select %p32, %s33, %s34
    %p38 = pneg %p32
    %p39 = scmp.eq.s32.totalorder %s9, 1
    %p40 = por %p38, %p39
    %p41 = scmp.ne.s32.totalorder %s33, %s36
    %p42 = scmp.eq.s32.totalorder %s9, 0
    %p43 = por %p41, %p42
    %p44 = scmp.ne.s32.totalorder %s33, %s36
    %p45 = scmp.eq.s32.totalorder %s14, 1
    %p46 = por %p44, %p45
    %p47 = scmp.ne.s32.totalorder %s36, %s37
    %p48 = scmp.eq.s32.totalorder %s14, 0
    %p49 = por %p47, %p48
    %p50 = scmp.ne.s32.totalorder %s36, %s37
    %p51 = scmp.eq.s32.totalorder %s15, 1
    %p52 = por %p50, %p51
    %p54 = scmp.ne.s32.totalorder %s37, %s53
    %p55 = scmp.eq.s32.totalorder %s15, 0
    %p56 = por %p54, %p55
    %s58 = sadd.s32 %s57, 1
    %p61 = scmp.eq.s32.totalorder %s9, 1
    %p62 = scmp.ne.s32.totalorder %s57, %s59
    %p63 = scmp.eq.s32.totalorder %s9, 0
    %p64 = por %p62, %p63
    %p65 = scmp.ne.s32.totalorder %s57, %s59
    %p66 = scmp.eq.s32.totalorder %s14, 1
    %p67 = por %p65, %p66
    %p68 = scmp.ne.s32.totalorder %s59, %s60
    %p69 = scmp.eq.s32.totalorder %s14, 0
    %p70 = por %p68, %p69
    %p71 = scmp.ne.s32.totalorder %s59, %s60
    %p72 = scmp.eq.s32.totalorder %s15, 1
    %p73 = por %p71, %p72
    %p75 = scmp.ne.s32.totalorder %s60, %s74
    %p76 = scmp.eq.s32.totalorder %s15, 0
    %p77 = por %p75, %p76
    %s79 = sadd.s32 %s78, 1
    %p82 = scmp.eq.s32.totalorder %s9, 1
    %p83 = scmp.ne.s32.totalorder %s78, %s80
    %p84 = scmp.eq.s32.totalorder %s9, 0
    %p85 = por %p83, %p84
    %p86 = scmp.ne.s32.totalorder %s78, %s80
    %p87 = scmp.eq.s32.totalorder %s14, 1
    %p88 = por %p86, %p87
    %p89 = scmp.ne.s32.totalorder %s80, %s81
    %p90 = scmp.eq.s32.totalorder %s14, 0
    %p91 = por %p89, %p90
    %p92 = scmp.ne.s32.totalorder %s80, %s81
    %p93 = scmp.eq.s32.totalorder %s15, 1
    %p94 = por %p92, %p93
    %p96 = scmp.ne.s32.totalorder %s81, %s95
    %p97 = scmp.eq.s32.totalorder %s15, 0
    %p98 = por %p96, %p97
    %s99 = ssub.s32 %s16, %s28
    %s100 = ssub.s32 %s17, %s24
    %s101 = sor.u32 %s99, %s100
    %p102 = scmp.eq.s32.totalorder %s101, 0
    %s104 = sadd.s32 %s103, 1
    %s105 = scalar_select %p102, %s103, %s104
    %p108 = pneg %p102
    %p109 = scmp.eq.s32.totalorder %s9, 1
    %p110 = por %p108, %p109
    %p111 = scmp.ne.s32.totalorder %s103, %s106
    %p112 = scmp.eq.s32.totalorder %s9, 0
    %p113 = por %p111, %p112
    %p114 = scmp.ne.s32.totalorder %s103, %s106
    %p115 = scmp.eq.s32.totalorder %s14, 1
    %p116 = por %p114, %p115
    %p117 = scmp.ne.s32.totalorder %s106, %s107
    %p118 = scmp.eq.s32.totalorder %s14, 0
    %p119 = por %p117, %p118
    %p120 = scmp.ne.s32.totalorder %s106, %s107
    %p121 = scmp.eq.s32.totalorder %s15, 1
    %p122 = por %p120, %p121
    %p124 = scmp.ne.s32.totalorder %s107, %s123
    %p125 = scmp.eq.s32.totalorder %s15, 0
    %p126 = por %p124, %p125
    %p127 = scmp.le.s32.totalorder 1, %s9
    %p128 = scmp.lt.s32.totalorder %s9, 3
    %p129 = pnand %p127, %p128
    %p130 = pneg %p129
    // Predicated region
    $region9: #{upsample_block.1} parent=5 // pred_check
      _
    $region10: #{upsample_block.1} parent=5 // pred_check_branch
      %132 = sbr.rel (%p129) target = $region12
    $region11: #{upsample_block.1} parent=5 // pred_region
      %s133 = ssub.s32 %s9, 1
      // Predicated region
      $region13: #{upsample_block.1} parent=11 // pred_check
        %p134 = pneg %p70
      $region14: #{upsample_block.1} parent=11 // pred_check_branch
        %136 = sbr.rel (%p134) target = $region16
      $region15: #{upsample_block.1} parent=11 // pred_region
        _
      $region16: #{upsample_block.1} parent=11 // pred_fallthru
        _
      // Predicated region
      $region17: #{upsample_block.1} parent=11 // pred_check
        %p137 = pneg %p91
      $region18: #{upsample_block.1} parent=11 // pred_check_branch
        %139 = sbr.rel (%p137) target = $region20
      $region19: #{upsample_block.1} parent=11 // pred_region
        _
      $region20: #{upsample_block.1} parent=11 // pred_fallthru
        _
    $region12: #{upsample_block.1} parent=5 // pred_fallthru
      _
    %p140 = scmp.lt.s32.totalorder %s9, 2
    // Predicated region
    $region21: #{upsample_block.1} parent=5 // pred_check
      %p141 = pneg %p140
    $region22: #{upsample_block.1} parent=5 // pred_check_branch
      %143 = sbr.rel (%p141) target = $region24
    $region23: #{upsample_block.1} parent=5 // pred_region
      // Predicated region
      $region25: #{upsample_block.1} parent=23 // pred_check
        %p144 = pneg %p43
      $region26: #{upsample_block.1} parent=23 // pred_check_branch
        %146 = sbr.rel (%p144) target = $region28
      $region27: #{upsample_block.1} parent=23 // pred_region
        %s147 = smul.u32 2, %s17
        %p148 = scmp.lt.s32.totalorder %s16, 1
        %s149 = scalar_select %p148, %s16, 1
        %p150 = scmp.lt.s32.totalorder %s147, 1
        %s151 = scalar_select %p150, %s147, 1
        %s152 = smul.addr %s149, 18
        %s153 = sadd.s32 %s151, %s152
        %s154 = smul.addr %s153, 4
        %s155 = scalar_lea.vmem %s0, %s154
        %s156 = smul.u32 2, %s17
      $region28: #{upsample_block.1} parent=23 // pred_fallthru
        _
    $region24: #{upsample_block.1} parent=5 // pred_fallthru
      _
    %p157 = scmp.le.s32.totalorder 1, %s9
    %p158 = scmp.lt.s32.totalorder %s9, 3
    %p159 = pnand %p157, %p158
    %p160 = pneg %p159
    // Predicated region
    $region29: #{upsample_block.1} parent=5 // pred_check
      _
    $region30: #{upsample_block.1} parent=5 // pred_check_branch
      %162 = sbr.rel (%p159) target = $region32
    $region31: #{upsample_block.1} parent=5 // pred_region
      %s163 = ssub.s32 %s9, 1
      %s164 = smul.u32 2, %s19
      %p165 = scmp.lt.s32.totalorder %s18, 1
      %s166 = scalar_select %p165, %s18, 1
      %p167 = scmp.lt.s32.totalorder %s164, 1
      %s168 = scalar_select %p167, %s164, 1
      %s169 = smul.addr %s166, 18
      %s170 = sadd.s32 %s168, %s169
      %s171 = smul.addr %s170, 4
      %s172 = scalar_lea.vmem %s0, %s171
      %p173 = pneg %p49
      %p174 = pneg %p46
      %p175 = pneg %p70
      %p176 = pneg %p67
      %p177 = pneg %p91
      %p178 = pneg %p88
      %p179 = pneg %p119
      %p180 = pneg %p116
      %s181 = smul.u32 2, %s19
      %p182 = scmp.lt.s32.totalorder %s18, 1
      %s183 = scalar_select %p182, %s18, 1
      %p184 = scmp.lt.s32.totalorder %s181, 1
      %s185 = scalar_select %p184, %s181, 1
      %s186 = smul.addr %s183, 8
      %s187 = sadd.s32 %s185, %s186
      %s188 = smul.addr %s187, 8
      %s189 = scalar_lea.vmem %s3, %s188
      %s190 = smul.u32 2, %s19
      %p191 = scmp.lt.s32.totalorder %s18, 1
      %s192 = scalar_select %p191, %s18, 1
      %p193 = scmp.lt.s32.totalorder %s190, 1
      %s194 = scalar_select %p193, %s190, 1
      %s195 = smul.addr %s192, 18
      %s196 = sadd.s32 %s194, %s195
      %s197 = smul.addr %s196, 4
      %s198 = scalar_lea.vmem %s0, %s197
      %s199 = smul.u32 2, %s19
      %s200 = smul.u32 2, %s19
      %p201 = scmp.lt.s32.totalorder %s18, 1
      %s202 = scalar_select %p201, %s18, 1
      %p203 = scmp.lt.s32.totalorder %s200, 1
      %s204 = scalar_select %p203, %s200, 1
      %s205 = smul.addr %s202, 8
      %s206 = sadd.s32 %s204, %s205
      %s207 = smul.addr %s206, 8
      %s208 = scalar_lea.vmem %s3, %s207
      %s209 = smul.u32 2, %s19
      %v211 = vld [vmem:[%s1] sm:$0xf]
      %v212 = vld [vmem:[%s1 + $0x4] sm:$0xf]
      %v213 = vld [vmem:[%s1 + $0x8] sm:$0xf]
      %v214 = vld [vmem:[%s1 + $0xc] sm:$0xf]
      %v215 = vld [vmem:[%s198] sm:$0xff]
      %v216 = vld [vmem:[%s198 + $0x8] sm:$0xff]
      %v217 = vld [vmem:[%s198 + $0x10] sm:$0xff]
      %v218 = vld [vmem:[%s198 + $0x18] sm:$0xff]
      %v219 = vld [vmem:[%s198 + $0x20] sm:$0xff]
      %v220 = vld [vmem:[%s198 + $0x28] sm:$0xff]
      %v221 = vld [vmem:[%s198 + $0x30] sm:$0xff]
      %v222 = vld [vmem:[%s198 + $0x38] sm:$0xff]
      %v223 = vld [vmem:[%s198 + $0x40] sm:$0xff]
      %v224 = vld [vmem:[%s2] sm:$0xff]
      %v225 = vld [vmem:[%s2 + $0x8] sm:$0xff]
      %v226 = vld [vmem:[%s2 + $0x10] sm:$0xff]
      %v227 = vld [vmem:[%s2 + $0x18] sm:$0xff]
      %229 = vset.pattern.permute.xlu0 0
      %230 = vperm.xlu0 %229, %v224
      %v231 = vpop.permute.xlu0 %230
      %234 = vset.pattern.permute.xlu0 0
      %235 = vperm.xlu0 %234, %v225
      %v236 = vpop.permute.xlu0 %235
      %239 = vset.pattern.permute.xlu0 0
      %240 = vperm.xlu0 %239, %v226
      %v241 = vpop.permute.xlu0 %240
      %244 = vset.pattern.permute.xlu0 0
      %245 = vperm.xlu0 %244, %v227
      %v246 = vpop.permute.xlu0 %245
      %v252 = vunpack.c.l.b16 %v211
      %v253 = vunpack.c.l.b16 %v212
      %v254 = vunpack.c.l.b16 %v213
      %v255 = vunpack.c.l.b16 %v214
      %v256 = vpack.c.b16 %v253, %v252
      %v257 = vpack.c.b16 %v255, %v254
      %v267 = vunpack.c.l.b16 %v215
      %v268 = vunpack.c.h.b16 %v215
      %v269 = vunpack.c.l.b16 %v216
      %v270 = vunpack.c.h.b16 %v216
      %v271 = vunpack.c.l.b16 %v217
      %v272 = vunpack.c.h.b16 %v217
      %v273 = vunpack.c.l.b16 %v218
      %v274 = vunpack.c.h.b16 %v218
      %v275 = vunpack.c.l.b16 %v219
      %v276 = vunpack.c.h.b16 %v219
      %v277 = vunpack.c.l.b16 %v220
      %v278 = vunpack.c.h.b16 %v220
      %v279 = vunpack.c.l.b16 %v221
      %v280 = vunpack.c.h.b16 %v221
      %v281 = vunpack.c.l.b16 %v222
      %v282 = vunpack.c.h.b16 %v222
      %v283 = vunpack.c.l.b16 %v223
      %v284 = vunpack.c.h.b16 %v223
      %v285 = vpack.c.b16 %v269, %v267
      %v286 = vpack.c.b16 %v270, %v268
      %v287 = vpack.c.b16 %v273, %v271
      %v288 = vpack.c.b16 %v274, %v272
      %v289 = vpack.c.b16 %v277, %v275
      %v290 = vpack.c.b16 %v278, %v276
      %v291 = vpack.c.b16 %v281, %v279
      %v292 = vpack.c.b16 %v282, %v280
      %v293 = vpack.c.b16 %v283, %v283
      %v294 = vpack.c.b16 %v284, %v284
      %vm303 = vcmask 588800
      %v305 = vsel %vm303, %v256, 0
      %v308 = vsel %vm303, %v257, 0
      %vm310 = vcmask 1043456
      %v312 = vsel %vm310, %v293, 0
      %v315 = vsel %vm310, %v294, 0
      %317 = vmatprep.subr.bf16.mxu0 %v286
      %318 = vmatpush1.bf16.msra.mxu0 %v285
      %319 = vmatprep.subr.bf16.mxu0 %v288
      %320 = vmatpush1.bf16.msra.mxu0 %v287
      %321 = vmatprep.subr.bf16.mxu0 %v290
      %322 = vmatpush1.bf16.msra.mxu0 %v289
      %323 = vmatprep.subr.bf16.mxu0 %v292
      %324 = vmatpush1.bf16.msra.mxu0 %v291
      %325 = vmatprep.subr.bf16.mxu0 %v315
      %326 = vmatpush1.bf16.msra.mxu0 %v312
      %327 = vmatprep.subr.bf16.mxu0 0
      %328 = vmatpush1.bf16.msra.mxu0 0
      %329 = vmatprep.subr.bf16.mxu0 0
      %330 = vmatpush1.bf16.msra.mxu0 0
      %331 = vmatprep.subr.bf16.mxu0 0
      %332 = vmatpush1.bf16.msra.mxu0 0
      %333 = vmatprep.subr.bf16.mxu0 0
      %334 = vmatpush1.bf16.msra.mxu0 0
      %335 = vmatprep.subr.bf16.mxu0 0
      %336 = vmatpush1.bf16.msra.mxu0 0
      %337 = vmatprep.subr.bf16.mxu0 0
      %338 = vmatpush1.bf16.msra.mxu0 0
      %339 = vmatprep.subr.bf16.mxu0 0
      %340 = vmatpush1.bf16.msra.mxu0 0
      %341 = vmatprep.subr.bf16.mxu0 0
      %342 = vmatpush1.bf16.msra.mxu0 0
      %343 = vmatprep.subr.bf16.mxu0 0
      %344 = vmatpush1.bf16.msra.mxu0 0
      %345 = vmatprep.subr.bf16.mxu0 0
      %346 = vmatpush1.bf16.msra.mxu0 0
      %347 = vmatprep.subr.bf16.mxu0 0
      %348 = vmatpush1.bf16.msra.mxu0 0
      %349 = vmatprep.mubr.bf16.mxu0 0
      %350 = vmatmul.mubr.bf16.gmra.mrb[0].mxu0 %v305
      %v351 = vpop.f32.mrb[0].mxu0
      %v352 = vadd.f32 %v231, %v351
      %v353 = vpop.f32.mrb[0].mxu0
      %v354 = vadd.f32 %v231, %v353
      %v355 = vpop.f32.mrb[0].mxu0
      %v356 = vadd.f32 %v236, %v355
      %v357 = vpop.f32.mrb[0].mxu0
      %v358 = vadd.f32 %v236, %v357
      %359 = vmatprep.mubr.bf16.mxu0 0
      %360 = vmatmul.mubr.bf16.gmra.mrb[0].mxu0 %v308
      %v361 = vpop.f32.mrb[0].mxu0
      %v362 = vadd.f32 %v241, %v361
      %v363 = vpop.f32.mrb[0].mxu0
      %v364 = vadd.f32 %v241, %v363
      %v365 = vpop.f32.mrb[0].mxu0
      %v366 = vadd.f32 %v246, %v365
      %v367 = vpop.f32.mrb[0].mxu0
      %v368 = vadd.f32 %v246, %v367
      %369 = vdwg.mxu0
      %v370 = vxor.u32 %v352, 2147483648
      %v371 = vxor.u32 %v354, 2147483648
      %v372 = vxor.u32 %v356, 2147483648
      %v373 = vxor.u32 %v358, 2147483648
      %v374 = vxor.u32 %v362, 2147483648
      %v375 = vxor.u32 %v364, 2147483648
      %v376 = vxor.u32 %v366, 2147483648
      %v377 = vxor.u32 %v368, 2147483648
      %v378 = vmul.f32 %v370, 1.442695
      %v379 = vpow.pop %v378
      %v380 = vmul.f32 %v371, 1.442695
      %v381 = vpow.pop %v380
      %v382 = vmul.f32 %v372, 1.442695
      %v383 = vpow.pop %v382
      %v384 = vmul.f32 %v373, 1.442695
      %v385 = vpow.pop %v384
      %v386 = vmul.f32 %v374, 1.442695
      %v387 = vpow.pop %v386
      %v388 = vmul.f32 %v375, 1.442695
      %v389 = vpow.pop %v388
      %v390 = vmul.f32 %v376, 1.442695
      %v391 = vpow.pop %v390
      %v392 = vmul.f32 %v377, 1.442695
      %v393 = vpow.pop %v392
      %v394 = vadd.f32 %v379, 1.0
      %v395 = vadd.f32 %v381, 1.0
      %v396 = vadd.f32 %v383, 1.0
      %v397 = vadd.f32 %v385, 1.0
      %v398 = vadd.f32 %v387, 1.0
      %v399 = vadd.f32 %v389, 1.0
      %v400 = vadd.f32 %v391, 1.0
      %v401 = vadd.f32 %v393, 1.0
      %v402 = vrcp.pop %v394
      %v403 = vmul.f32 1.0, %v402
      %v404 = vrcp.pop %v395
      %v405 = vmul.f32 1.0, %v404
      %v406 = vrcp.pop %v396
      %v407 = vmul.f32 1.0, %v406
      %v408 = vrcp.pop %v397
      %v409 = vmul.f32 1.0, %v408
      %v410 = vrcp.pop %v398
      %v411 = vmul.f32 1.0, %v410
      %v412 = vrcp.pop %v399
      %v413 = vmul.f32 1.0, %v412
      %v414 = vrcp.pop %v400
      %v415 = vmul.f32 1.0, %v414
      %v416 = vrcp.pop %v401
      %v417 = vmul.f32 1.0, %v416
      %v418 = vmul.f32 %v352, %v403
      %v419 = vmul.f32 %v354, %v405
      %v420 = vmul.f32 %v356, %v407
      %v421 = vmul.f32 %v358, %v409
      %v422 = vmul.f32 %v362, %v411
      %v423 = vmul.f32 %v364, %v413
      %v424 = vmul.f32 %v366, %v415
      %v425 = vmul.f32 %v368, %v417
      %426 = vst [vmem:[%s208] sm:$0xff] %v418
      %427 = vst [vmem:[%s208 + $0x8] sm:$0xff] %v419
      %428 = vst [vmem:[%s208 + $0x10] sm:$0xff] %v420
      %429 = vst [vmem:[%s208 + $0x18] sm:$0xff] %v421
      %430 = vst [vmem:[%s208 + $0x20] sm:$0xff] %v422
      %431 = vst [vmem:[%s208 + $0x28] sm:$0xff] %v423
      %432 = vst [vmem:[%s208 + $0x30] sm:$0xff] %v424
      %433 = vst [vmem:[%s208 + $0x38] sm:$0xff] %v425
      %s434 = smul.u32 2, %s19
      %p435 = scmp.lt.s32.totalorder %s18, 1
      %s436 = scalar_select %p435, %s18, 1
      %p437 = scmp.lt.s32.totalorder %s434, 1
      %s438 = scalar_select %p437, %s434, 1
      %s439 = smul.addr %s436, 8
      %s440 = sadd.s32 %s438, %s439
      %s441 = smul.addr %s440, 8
      %s442 = scalar_lea.vmem %s3, %s441
      // Predicated region
      $region33: #{upsample_block.1} parent=31 // pred_check
        %p443 = pneg %p116
      $region34: #{upsample_block.1} parent=31 // pred_check_branch
        %445 = sbr.rel (%p443) target = $region36
      $region35: #{upsample_block.1} parent=31 // pred_region
        %s446 = smul.u32 2, %s19
      $region36: #{upsample_block.1} parent=31 // pred_fallthru
        _
    $region32: #{upsample_block.1} parent=5 // pred_fallthru
      _
    %p447 = scmp.le.s32.totalorder 2, %s9
    // Predicated region
    $region37: #{upsample_block.1} parent=5 // pred_check
      %p448 = pneg %p447
    $region38: #{upsample_block.1} parent=5 // pred_check_branch
      %450 = sbr.rel (%p448) target = $region40
    $region39: #{upsample_block.1} parent=5 // pred_region
      %s451 = ssub.s32 %s9, 2
      // Predicated region
      $region41: #{upsample_block.1} parent=39 // pred_check
        %p452 = pneg %p122
      $region42: #{upsample_block.1} parent=39 // pred_check_branch
        %454 = sbr.rel (%p452) target = $region44
      $region43: #{upsample_block.1} parent=39 // pred_region
        %s455 = smul.u32 2, %s21
        %p456 = scmp.lt.s32.totalorder %s20, 1
        %s457 = scalar_select %p456, %s20, 1
        %p458 = scmp.lt.s32.totalorder %s455, 1
        %s459 = scalar_select %p458, %s455, 1
        %s460 = smul.addr %s457, 8
        %s461 = sadd.s32 %s459, %s460
        %s462 = smul.addr %s461, 8
        %s463 = scalar_lea.vmem %s3, %s462
      $region44: #{upsample_block.1} parent=39 // pred_fallthru
        _
    $region40: #{upsample_block.1} parent=5 // pred_fallthru
      _
  $region6: #{upsample_block.1} parent=0 // loop_footer
    %s13 = sadd.s32 1, %s9
  $region7: #{upsample_block.1} parent=0 // loop_footer_branch
    %8 = sbr.rel target = $region3
  $region8: #{upsample_block.1} parent=0 // loop_exit
    _

</llo_original>
